<compile_context>
chip_gen: v7x
topology: tpu7x:2x2x1
jax: 0.10.0
libtpu: 0.0.40
codegen_flags: <defaults>
</compile_context>

<pallas_src>
import jax
import jax.numpy as jnp
from jax.experimental import pallas as pl
from jax.experimental.pallas import tpu as pltpu


def backproject_kernel(invk_ref, pix_ref, depth_ref, o_ref):
    # invk_ref : SMEM (B, 9)          flattened inv_K[:, :3, :3], row-major
    # pix_ref  : VMEM (2, TS, 128)    rows = [x, y] pixel coords for this HW tile
    # depth_ref: VMEM (1, TS, 128)    depth for this (batch, HW-tile)
    # o_ref    : VMEM (1, 4, TS, 128) output rows [X, Y, Z, 1] for this tile
    b = pl.program_id(1)                          # batch is the inner grid axis

    d = depth_ref[0]                              # (TS, 128) dense vregs
    x = pix_ref[0]                                # (TS, 128)
    y = pix_ref[1]                                # (TS, 128)

    for i in range(3):                            # statically unrolled VPU FMAs
        k0 = invk_ref[b, 3 * i + 0]
        k1 = invk_ref[b, 3 * i + 1]
        k2 = invk_ref[b, 3 * i + 2]               # third pix row is all ones
        o_ref[0, i] = ((k0 * x + k1 * y + k2) * d).astype(o_ref.dtype)

    o_ref[0, 3] = jnp.ones_like(d).astype(o_ref.dtype)   # homogeneous row


def _pick_sublane_tile(S, target=512):
    """Largest divisor of S that is a multiple of 8 and <= target; else S."""
    best = None
    d = 8
    while d <= min(S, target):
        if S % d == 0:
            best = d
        d += 8
    return best if best is not None else S


def backproject_depth_pallas(depth, inv_K, height, width):
    """Forward pass matching PyTorch BackprojectDepth.

    depth: (B, 1, H, W)
    inv_K: (B, 4, 4)
    returns: (B, 4, H*W) float32
    """
    B = depth.shape[0]
    HW = height * width
    assert depth.shape == (B, 1, height, width), "depth must be (B, 1, H, W)"
    assert HW % 128 == 0, "H*W must be a multiple of 128"

    S = HW // 128                        # sublane-folded spatial extent
    TS = _pick_sublane_tile(S)           # sublanes per grid step
    num_tiles = S // TS

    # --- constant pixel-coordinate table (module buffers), folded to (2, S, 128) ---
    xs, ys = jnp.meshgrid(jnp.arange(width, dtype=jnp.float32),
                          jnp.arange(height, dtype=jnp.float32), indexing="xy")
    pix = jnp.stack([xs.reshape(S, 128), ys.reshape(S, 128)], axis=0)  # (2, S, 128)

    depth_f = depth.reshape(B, S, 128).astype(jnp.float32)            # free reshape
    invk = inv_K[:, :3, :3].reshape(B, 9).astype(jnp.float32)

    out = pl.pallas_call(
        backproject_kernel,
        out_shape=jax.ShapeDtypeStruct((B, 4, S, 128), jnp.float32),
        grid_spec=pltpu.PrefetchScalarGridSpec(
            num_scalar_prefetch=0,
            # HW-tile axis OUTER, batch INNER => pix block reused across batch.
            grid=(num_tiles, B),
            in_specs=[
                # tiny 3x3 matrices -> SMEM scalars, no MXU / no padded VMEM tiles
                pl.BlockSpec(memory_space=pltpu.MemorySpace.SMEM),
                # shared (x, y) table for this HW tile
                pl.BlockSpec((2, TS, 128), lambda t, b: (0, t, 0)),
                # per-(batch, tile) depth block
                pl.BlockSpec((1, TS, 128), lambda t, b: (b, t, 0)),
            ],
            out_specs=pl.BlockSpec((1, 4, TS, 128), lambda t, b: (b, 0, t, 0)),
        ),
        compiler_params=pltpu.CompilerParams(
            dimension_semantics=("parallel", "parallel")),
    )(invk, pix, depth_f)

    return out.reshape(B, 4, HW)


def backproject_depth_reference(depth, inv_K, height, width):
    """Pure-JAX reference matching PyTorch semantics."""
    B = depth.shape[0]
    HW = height * width
    xs, ys = jnp.meshgrid(jnp.arange(width, dtype=jnp.float32),
                          jnp.arange(height, dtype=jnp.float32), indexing="xy")
    pix = jnp.stack([xs.reshape(-1), ys.reshape(-1),
                     jnp.ones((HW,), jnp.float32)], axis=0)          # (3, HW)
    cam = jnp.einsum("bij,jk->bik", inv_K[:, :3, :3], pix)           # (B, 3, HW)
    cam = depth.reshape(B, 1, HW) * cam
    ones = jnp.ones((B, 1, HW), jnp.float32)
    return jnp.concatenate([cam, ones], axis=1)                      # (B, 4, HW)


if __name__ == "__main__":
    key = jax.random.PRNGKey(0)
    kd, kk = jax.random.split(key, 2)

    B, H, W = 2, 16, 16

    # Deterministic inputs: positive depth map + plausible inverse intrinsics.
    depth = jax.random.uniform(kd, (B, 1, H, W), jnp.float32,
                               minval=0.1, maxval=10.0)
    K = jnp.array([[0.58 * W, 0.0,      0.5 * W, 0.0],
                   [0.0,      1.92 * H, 0.5 * H, 0.0],
                   [0.0,      0.0,      1.0,     0.0],
                   [0.0,      0.0,      0.0,     1.0]], jnp.float32)
    inv_K = jnp.broadcast_to(jnp.linalg.inv(K), (B, 4, 4))
    inv_K = inv_K + 0.01 * jax.random.normal(kk, (B, 4, 4), jnp.float32)

    out = backproject_depth_pallas(depth, inv_K, H, W)
    out = jax.block_until_ready(out)

    ref = backproject_depth_reference(depth, inv_K, H, W)
    assert out.shape == (B, 4, H * W)
    assert jnp.allclose(out, ref, atol=1e-4, rtol=1e-4), "mismatch vs reference"

    print("KERNEL_OK")
</pallas_src>

<mosaic_0001>
module attributes {stable_mosaic.version = 11 : i64} {
  func.func @backproject_kernel(%arg0: i32, %arg1: i32, %arg2: memref<2x9xf32, #tpu.memory_space<smem>>, %arg3: memref<2x2x128xf32, #tpu.memory_space<vmem>>, %arg4: memref<1x2x128xf32, #tpu.memory_space<vmem>>, %arg5: memref<1x4x2x128xf32, #tpu.memory_space<vmem>>) attributes {dimension_semantics = [#tpu.dimension_semantics<parallel>, #tpu.dimension_semantics<parallel>], iteration_bounds = array<i64: 1, 2>, scalar_prefetch = 0 : i64, scratch_operands = 0 : i64, tpu.core_type = #tpu.core_type<tc>, window_params = [{transform_indices = @transform_0, window_bounds = array<i64: 2, 9>}, {transform_indices = @transform_1, window_bounds = array<i64: 2, 2, 128>}, {transform_indices = @transform_2, window_bounds = array<i64: 1, 2, 128>}, {transform_indices = @transform_3, window_bounds = array<i64: 1, 4, 2, 128>}]} {
    %c0 = arith.constant 0 : index
    %c0_0 = arith.constant 0 : index
    %c0_1 = arith.constant 0 : index
    %0 = vector.load %arg4[%c0, %c0_0, %c0_1] : memref<1x2x128xf32, #tpu.memory_space<vmem>>, vector<1x2x128xf32>
    %1 = vector.shape_cast %0 : vector<1x2x128xf32> to vector<2x128xf32>
    %c0_2 = arith.constant 0 : index
    %c0_3 = arith.constant 0 : index
    %c0_4 = arith.constant 0 : index
    %2 = vector.load %arg3[%c0_2, %c0_3, %c0_4] : memref<2x2x128xf32, #tpu.memory_space<vmem>>, vector<1x2x128xf32>
    %3 = vector.shape_cast %2 : vector<1x2x128xf32> to vector<2x128xf32>
    %c1 = arith.constant 1 : index
    %c0_5 = arith.constant 0 : index
    %c0_6 = arith.constant 0 : index
    %4 = vector.load %arg3[%c1, %c0_5, %c0_6] : memref<2x2x128xf32, #tpu.memory_space<vmem>>, vector<1x2x128xf32>
    %5 = vector.shape_cast %4 : vector<1x2x128xf32> to vector<2x128xf32>
    %6 = arith.index_cast %arg1 : i32 to index
    %c0_7 = arith.constant 0 : index
    %7 = memref.load %arg2[%6, %c0_7] : memref<2x9xf32, #tpu.memory_space<smem>>
    %8 = arith.index_cast %arg1 : i32 to index
    %c1_8 = arith.constant 1 : index
    %9 = memref.load %arg2[%8, %c1_8] : memref<2x9xf32, #tpu.memory_space<smem>>
    %10 = arith.index_cast %arg1 : i32 to index
    %c2 = arith.constant 2 : index
    %11 = memref.load %arg2[%10, %c2] : memref<2x9xf32, #tpu.memory_space<smem>>
    %12 = vector.broadcast %7 : f32 to vector<2x128xf32>
    %13 = arith.mulf %12, %3 : vector<2x128xf32>
    %14 = vector.broadcast %9 : f32 to vector<2x128xf32>
    %15 = arith.mulf %14, %5 : vector<2x128xf32>
    %16 = arith.addf %13, %15 : vector<2x128xf32>
    %17 = vector.broadcast %11 : f32 to vector<2x128xf32>
    %18 = arith.addf %16, %17 : vector<2x128xf32>
    %19 = arith.mulf %18, %1 : vector<2x128xf32>
    %c0_9 = arith.constant 0 : index
    %c0_10 = arith.constant 0 : index
    %c0_11 = arith.constant 0 : index
    %c0_12 = arith.constant 0 : index
    %20 = vector.load %arg5[%c0_9, %c0_10, %c0_11, %c0_12] : memref<1x4x2x128xf32, #tpu.memory_space<vmem>>, vector<1x1x2x128xf32>
    %21 = vector.shape_cast %20 : vector<1x1x2x128xf32> to vector<2x128xf32>
    %22 = vector.shape_cast %19 : vector<2x128xf32> to vector<1x1x2x128xf32>
    tpu.vector_store %arg5[%c0_9, %c0_10, %c0_11, %c0_12], %22 {strides = array<i32>} : memref<1x4x2x128xf32, #tpu.memory_space<vmem>>, vector<1x1x2x128xf32>,
    %23 = arith.index_cast %arg1 : i32 to index
    %c3 = arith.constant 3 : index
    %24 = memref.load %arg2[%23, %c3] : memref<2x9xf32, #tpu.memory_space<smem>>
    %25 = arith.index_cast %arg1 : i32 to index
    %c4 = arith.constant 4 : index
    %26 = memref.load %arg2[%25, %c4] : memref<2x9xf32, #tpu.memory_space<smem>>
    %27 = arith.index_cast %arg1 : i32 to index
    %c5 = arith.constant 5 : index
    %28 = memref.load %arg2[%27, %c5] : memref<2x9xf32, #tpu.memory_space<smem>>
    %29 = vector.broadcast %24 : f32 to vector<2x128xf32>
    %30 = arith.mulf %29, %3 : vector<2x128xf32>
    %31 = vector.broadcast %26 : f32 to vector<2x128xf32>
    %32 = arith.mulf %31, %5 : vector<2x128xf32>
    %33 = arith.addf %30, %32 : vector<2x128xf32>
    %34 = vector.broadcast %28 : f32 to vector<2x128xf32>
    %35 = arith.addf %33, %34 : vector<2x128xf32>
    %36 = arith.mulf %35, %1 : vector<2x128xf32>
    %c0_13 = arith.constant 0 : index
    %c1_14 = arith.constant 1 : index
    %c0_15 = arith.constant 0 : index
    %c0_16 = arith.constant 0 : index
    %37 = vector.load %arg5[%c0_13, %c1_14, %c0_15, %c0_16] : memref<1x4x2x128xf32, #tpu.memory_space<vmem>>, vector<1x1x2x128xf32>
    %38 = vector.shape_cast %37 : vector<1x1x2x128xf32> to vector<2x128xf32>
    %39 = vector.shape_cast %36 : vector<2x128xf32> to vector<1x1x2x128xf32>
    tpu.vector_store %arg5[%c0_13, %c1_14, %c0_15, %c0_16], %39 {strides = array<i32>} : memref<1x4x2x128xf32, #tpu.memory_space<vmem>>, vector<1x1x2x128xf32>,
    %40 = arith.index_cast %arg1 : i32 to index
    %c6 = arith.constant 6 : index
    %41 = memref.load %arg2[%40, %c6] : memref<2x9xf32, #tpu.memory_space<smem>>
    %42 = arith.index_cast %arg1 : i32 to index
    %c7 = arith.constant 7 : index
    %43 = memref.load %arg2[%42, %c7] : memref<2x9xf32, #tpu.memory_space<smem>>
    %44 = arith.index_cast %arg1 : i32 to index
    %c8 = arith.constant 8 : index
    %45 = memref.load %arg2[%44, %c8] : memref<2x9xf32, #tpu.memory_space<smem>>
    %46 = vector.broadcast %41 : f32 to vector<2x128xf32>
    %47 = arith.mulf %46, %3 : vector<2x128xf32>
    %48 = vector.broadcast %43 : f32 to vector<2x128xf32>
    %49 = arith.mulf %48, %5 : vector<2x128xf32>
    %50 = arith.addf %47, %49 : vector<2x128xf32>
    %51 = vector.broadcast %45 : f32 to vector<2x128xf32>
    %52 = arith.addf %50, %51 : vector<2x128xf32>
    %53 = arith.mulf %52, %1 : vector<2x128xf32>
    %c0_17 = arith.constant 0 : index
    %c2_18 = arith.constant 2 : index
    %c0_19 = arith.constant 0 : index
    %c0_20 = arith.constant 0 : index
    %54 = vector.load %arg5[%c0_17, %c2_18, %c0_19, %c0_20] : memref<1x4x2x128xf32, #tpu.memory_space<vmem>>, vector<1x1x2x128xf32>
    %55 = vector.shape_cast %54 : vector<1x1x2x128xf32> to vector<2x128xf32>
    %56 = vector.shape_cast %53 : vector<2x128xf32> to vector<1x1x2x128xf32>
    tpu.vector_store %arg5[%c0_17, %c2_18, %c0_19, %c0_20], %56 {strides = array<i32>} : memref<1x4x2x128xf32, #tpu.memory_space<vmem>>, vector<1x1x2x128xf32>,
    %cst = arith.constant 1.000000e+00 : f32
    %57 = vector.broadcast %cst : f32 to vector<2x128xf32>
    %c0_21 = arith.constant 0 : index
    %c3_22 = arith.constant 3 : index
    %c0_23 = arith.constant 0 : index
    %c0_24 = arith.constant 0 : index
    %58 = vector.load %arg5[%c0_21, %c3_22, %c0_23, %c0_24] : memref<1x4x2x128xf32, #tpu.memory_space<vmem>>, vector<1x1x2x128xf32>
    %59 = vector.shape_cast %58 : vector<1x1x2x128xf32> to vector<2x128xf32>
    %60 = vector.shape_cast %57 : vector<2x128xf32> to vector<1x1x2x128xf32>
    tpu.vector_store %arg5[%c0_21, %c3_22, %c0_23, %c0_24], %60 {strides = array<i32>} : memref<1x4x2x128xf32, #tpu.memory_space<vmem>>, vector<1x1x2x128xf32>,
    return
  }
  func.func @transform_0(%arg0: i32, %arg1: i32) -> (i32, i32) {
    %c0_i32 = arith.constant 0 : i32
    %c0_i32_0 = arith.constant 0 : i32
    %c0_i32_1 = arith.constant 0 : i32
    return %c0_i32, %c0_i32_0 : i32, i32
  }
  func.func @transform_1(%arg0: i32, %arg1: i32) -> (i32, i32, i32) {
    %c0_i32 = arith.constant 0 : i32
    %c0_i32_0 = arith.constant 0 : i32
    %c0_i32_1 = arith.constant 0 : i32
    return %c0_i32, %arg0, %c0_i32_0 : i32, i32, i32
  }
  func.func @transform_2(%arg0: i32, %arg1: i32) -> (i32, i32, i32) {
    %c0_i32 = arith.constant 0 : i32
    %c0_i32_0 = arith.constant 0 : i32
    return %arg1, %arg0, %c0_i32 : i32, i32, i32
  }
  func.func @transform_3(%arg0: i32, %arg1: i32) -> (i32, i32, i32, i32) {
    %c0_i32 = arith.constant 0 : i32
    %c0_i32_0 = arith.constant 0 : i32
    %c0_i32_1 = arith.constant 0 : i32
    return %arg1, %c0_i32, %arg0, %c0_i32_0 : i32, i32, i32, i32
  }
}

</mosaic_0001>

<llo_original>
// kernel: tpu_custom_call.1
$region0: #{tpu_custom_call.1}
  #allocation0 [shape = 'u32[]', space=smem, size = 0x4, offset = 0x4, fixed_abs, tag = 'smem constant byte address 0x4 - core index']
  #allocation1 [shape = 'u32[144,128]{1,0:T(1,128)}', space=vmem, size = 0x12000, scoped, tag = 'internal scratch']
  %s0 = inlined_call_operand.hbm [shape: f32[2,9], index: 0, kind: input, shape index: {}]
  %s1 = inlined_call_operand.hbm [shape: f32[2,2,128], index: 1, kind: input, shape index: {}]
  %s2 = inlined_call_operand.vmem [shape: f32[2,2,128], index: 2, kind: input, shape index: {}]
  %s3 = inlined_call_operand.hbm [shape: f32[2,4,2,128], index: 3, kind: output, shape index: {}]
  %s4 = sld [smem:[#allocation0]]
  $region53: #{tpu_custom_call.1} parent=0
    _
  %s6 = ssub.s32 1, %s4
  %s7 = scalar_select 0, %s6, %s4
  $region1: #{tpu_custom_call.1} parent=0
    #allocation2 [shape = 'u8[1024]{0}', space=smem, size = 0x400, scoped, tag = 'input window, operand 0, single buffered']
    #allocation3 [shape = 's32[2]{0}', space=sflag, size = 0x8, scoped, tag = 'scoped memory for tpu_custom_call.1']
    #allocation4 [shape = 's32[2]{0}', space=sflag, size = 0x8, scoped, tag = 'scoped memory for tpu_custom_call.1']
    #allocation5 [shape = 's32[2]{0}', space=sflag, size = 0x8, scoped, tag = 'scoped memory for tpu_custom_call.1']
    #allocation6 [shape = 'u8[2048]{0}', space=vmem, size = 0x800, scoped, tag = 'input window, operand 1, single buffered']
    #allocation7 [shape = 'u8[8192]{0}', space=vmem, size = 0x2000, scoped, tag = 'output window, operand 0']
    %8 = vsyncpa [#allocation5], 0
    %9 = vsyncpa [#allocation3], 0
    %10 = vsyncpa [#allocation4], 0
    %s11 = scalar_lea.sflag [#allocation4], 1
    %12 = vsyncpa %s11, 0
    loop: start=0, step=1, limit=4
    $region2: #{tpu_custom_call.1} parent=1 // loop_pre_header
      _
    $region3: #{tpu_custom_call.1} parent=1 // loop_header
      %s14 = sphi 0, %s18
      %p15 = scmp.ge.s32.totalorder %s14, 4
      %s21 = sphi 0, %s33
      %s22 = sphi 0, %s29
      %s23 = sphi 0, %s21
      %s24 = sphi 0, %s22
      %s25 = sphi 0, %s23
      %s26 = sphi 0, %s24
      %s34 = sphi 0, %s34
      %s36 = sphi 0, %s34
      %s37 = sphi 0, %s36
      %s51 = sphi 0, %s37
      %s57 = sphi 0, %s59
      %s60 = sphi 0, %s57
      %s61 = sphi 0, %s60
      %s77 = sphi 0, %s61
      %s85 = sphi 0, %s87
      %s88 = sphi 0, %s85
      %s89 = sphi 0, %s88
      %s105 = sphi 0, %s89
      %s113 = sphi 0, %s115
      %s116 = sphi 0, %s113
      %s117 = sphi 0, %s116
      %s133 = sphi 0, %s117
    $region4: #{tpu_custom_call.1} parent=1 // loop_header_branch
      %17 = sbr.rel (%p15) target = $region8
    $region5: #{tpu_custom_call.1} parent=1 // loop_body
      %s19 = ssub.s32 %s14, 1
      %s20 = ssub.s32 %s14, 2
      %s27 = sadd.s32 1, %s22
      %p28 = scmp.ge.s32.totalorder %s27, 2
      %s29 = scalar_select %p28, 0, %s27
      %s30 = sadd.s32 1, %s21
      %s31 = scalar_select %p28, %s30, %s21
      %p32 = scmp.ge.s32.totalorder %s31, 1
      %s33 = scalar_select %p32, 0, %s31
      %s35 = sadd.s32 %s34, 1
      %p38 = scmp.eq.s32.totalorder %s14, 1
      %p39 = scmp.ne.s32.totalorder %s34, %s36
      %p40 = scmp.eq.s32.totalorder %s14, 0
      %p41 = por %p39, %p40
      %p42 = scmp.ne.s32.totalorder %s34, %s36
      %p43 = scmp.eq.s32.totalorder %s19, 1
      %p44 = por %p42, %p43
      %p45 = scmp.ne.s32.totalorder %s36, %s37
      %p46 = scmp.eq.s32.totalorder %s19, 0
      %p47 = por %p45, %p46
      %p48 = scmp.ne.s32.totalorder %s36, %s37
      %p49 = scmp.eq.s32.totalorder %s20, 1
      %p50 = por %p48, %p49
      %p52 = scmp.ne.s32.totalorder %s37, %s51
      %p53 = scmp.eq.s32.totalorder %s20, 0
      %p54 = por %p52, %p53
      %s55 = ssub.s32 %s21, %s33
      %p56 = scmp.eq.s32.totalorder %s55, 0
      %s58 = sadd.s32 %s57, 1
      %s59 = scalar_select %p56, %s57, %s58
      %p62 = pneg %p56
      %p63 = scmp.eq.s32.totalorder %s14, 1
      %p64 = por %p62, %p63
      %p65 = scmp.ne.s32.totalorder %s57, %s60
      %p66 = scmp.eq.s32.totalorder %s14, 0
      %p67 = por %p65, %p66
      %p68 = scmp.ne.s32.totalorder %s57, %s60
      %p69 = scmp.eq.s32.totalorder %s19, 1
      %p70 = por %p68, %p69
      %p71 = scmp.ne.s32.totalorder %s60, %s61
      %p72 = scmp.eq.s32.totalorder %s19, 0
      %p73 = por %p71, %p72
      %p74 = scmp.ne.s32.totalorder %s60, %s61
      %p75 = scmp.eq.s32.totalorder %s20, 1
      %p76 = por %p74, %p75
      %p78 = scmp.ne.s32.totalorder %s61, %s77
      %p79 = scmp.eq.s32.totalorder %s20, 0
      %p80 = por %p78, %p79
      %s81 = ssub.s32 %s22, %s29
      %s82 = ssub.s32 %s21, %s33
      %s83 = sor.u32 %s81, %s82
      %p84 = scmp.eq.s32.totalorder %s83, 0
      %s86 = sadd.s32 %s85, 1
      %s87 = scalar_select %p84, %s85, %s86
      %p90 = pneg %p84
      %p91 = scmp.eq.s32.totalorder %s14, 1
      %p92 = por %p90, %p91
      %p93 = scmp.ne.s32.totalorder %s85, %s88
      %p94 = scmp.eq.s32.totalorder %s14, 0
      %p95 = por %p93, %p94
      %p96 = scmp.ne.s32.totalorder %s85, %s88
      %p97 = scmp.eq.s32.totalorder %s19, 1
      %p98 = por %p96, %p97
      %p99 = scmp.ne.s32.totalorder %s88, %s89
      %p100 = scmp.eq.s32.totalorder %s19, 0
      %p101 = por %p99, %p100
      %p102 = scmp.ne.s32.totalorder %s88, %s89
      %p103 = scmp.eq.s32.totalorder %s20, 1
      %p104 = por %p102, %p103
      %p106 = scmp.ne.s32.totalorder %s89, %s105
      %p107 = scmp.eq.s32.totalorder %s20, 0
      %p108 = por %p106, %p107
      %s109 = ssub.s32 %s22, %s29
      %s110 = ssub.s32 %s21, %s33
      %s111 = sor.u32 %s109, %s110
      %p112 = scmp.eq.s32.totalorder %s111, 0
      %s114 = sadd.s32 %s113, 1
      %s115 = scalar_select %p112, %s113, %s114
      %p118 = pneg %p112
      %p119 = scmp.eq.s32.totalorder %s14, 1
      %p120 = por %p118, %p119
      %p121 = scmp.ne.s32.totalorder %s113, %s116
      %p122 = scmp.eq.s32.totalorder %s14, 0
      %p123 = por %p121, %p122
      %p124 = scmp.ne.s32.totalorder %s113, %s116
      %p125 = scmp.eq.s32.totalorder %s19, 1
      %p126 = por %p124, %p125
      %p127 = scmp.ne.s32.totalorder %s116, %s117
      %p128 = scmp.eq.s32.totalorder %s19, 0
      %p129 = por %p127, %p128
      %p130 = scmp.ne.s32.totalorder %s116, %s117
      %p131 = scmp.eq.s32.totalorder %s20, 1
      %p132 = por %p130, %p131
      %p134 = scmp.ne.s32.totalorder %s117, %s133
      %p135 = scmp.eq.s32.totalorder %s20, 0
      %p136 = por %p134, %p135
      %p137 = scmp.le.s32.totalorder 1, %s14
      %p138 = scmp.lt.s32.totalorder %s14, 3
      %p139 = pnand %p137, %p138
      %p140 = pneg %p139
      // Predicated region
      $region9: #{tpu_custom_call.1} parent=5 // pred_check
        _
      $region10: #{tpu_custom_call.1} parent=5 // pred_check_branch
        %142 = sbr.rel (%p139) target = $region12
      $region11: #{tpu_custom_call.1} parent=5 // pred_region
        %s143 = ssub.s32 %s14, 1
        // Predicated region
        $region13: #{tpu_custom_call.1} parent=11 // pred_check
          %p144 = pneg %p47
        $region14: #{tpu_custom_call.1} parent=11 // pred_check_branch
          %146 = sbr.rel (%p144) target = $region16
        $region15: #{tpu_custom_call.1} parent=11 // pred_region
          %s148 = ssub.s32 32, 32
          %149 = vsyncadd [#allocation5], %s148
          %152 = dma.hbm_to_smem %s0, 32, [#allocation2], [#allocation5]
        $region16: #{tpu_custom_call.1} parent=11 // pred_fallthru
          _
        // Predicated region
        $region17: #{tpu_custom_call.1} parent=11 // pred_check
          %p153 = pneg %p73
        $region18: #{tpu_custom_call.1} parent=11 // pred_check_branch
          %155 = sbr.rel (%p153) target = $region20
        $region19: #{tpu_custom_call.1} parent=11 // pred_region
          %s157 = ssub.s32 64, 64
          %158 = vsyncadd [#allocation3], %s157
          %s159 = smul.addr %s23, 32
          %s160 = scalar_lea.hbm %s1, %s159
          %s161 = sshll.u32 [#allocation6], 4
          %s162 = int_to_ptr.vmem [resolvable:$true] %s161
          %167 = dma.hbm_to_vmem [thread:$0]  %s160, 64, %s162, [#allocation3], 32, 32, 2
        $region20: #{tpu_custom_call.1} parent=11 // pred_fallthru
          _
      $region12: #{tpu_custom_call.1} parent=5 // pred_fallthru
        _
      %p168 = scmp.lt.s32.totalorder %s14, 2
      // Predicated region
      $region21: #{tpu_custom_call.1} parent=5 // pred_check
        %p169 = pneg %p168
      $region22: #{tpu_custom_call.1} parent=5 // pred_check_branch
        %171 = sbr.rel (%p169) target = $region24
      $region23: #{tpu_custom_call.1} parent=5 // pred_region
        // Predicated region
        $region25: #{tpu_custom_call.1} parent=23 // pred_check
          %p172 = pneg %p95
        $region26: #{tpu_custom_call.1} parent=23 // pred_check_branch
          %174 = sbr.rel (%p172) target = $region28
        $region27: #{tpu_custom_call.1} parent=23 // pred_region
          %p175 = scmp.lt.s32.totalorder %s22, 1
          %s176 = scalar_select %p175, %s22, 1
          %p177 = scmp.lt.s32.totalorder %s21, 0
          %s178 = scalar_select %p177, %s21, 0
          %s179 = sadd.s32 %s178, %s176
          %s180 = smul.addr %s179, 2
          %s181 = scalar_lea.vmem %s2, %s180
        $region28: #{tpu_custom_call.1} parent=23 // pred_fallthru
          _
      $region24: #{tpu_custom_call.1} parent=5 // pred_fallthru
        _
      %p182 = scmp.le.s32.totalorder 1, %s14
      %p183 = scmp.lt.s32.totalorder %s14, 3
      %p184 = pnand %p182, %p183
      %p185 = pneg %p184
      // Predicated region
      $region29: #{tpu_custom_call.1} parent=5 // pred_check
        _
      $region30: #{tpu_custom_call.1} parent=5 // pred_check_branch
        %187 = sbr.rel (%p184) target = $region32
      $region31: #{tpu_custom_call.1} parent=5 // pred_region
        %s188 = ssub.s32 %s14, 1
        // Predicated region
        $region33: #{tpu_custom_call.1} parent=31 // pred_check
          %p189 = pneg %p47
        $region34: #{tpu_custom_call.1} parent=31 // pred_check_branch
          %191 = sbr.rel (%p189) target = $region36
        $region35: #{tpu_custom_call.1} parent=31 // pred_region
          %192 = dma.done [#allocation5], 32
        $region36: #{tpu_custom_call.1} parent=31 // pred_fallthru
          _
        // Predicated region
        $region37: #{tpu_custom_call.1} parent=31 // pred_check
          %p193 = pneg %p73
        $region38: #{tpu_custom_call.1} parent=31 // pred_check_branch
          %195 = sbr.rel (%p193) target = $region40
        $region39: #{tpu_custom_call.1} parent=31 // pred_region
          %196 = dma.done [#allocation3], 64
        $region40: #{tpu_custom_call.1} parent=31 // pred_fallthru
          _
        %197 = sfence
        %p198 = pneg %p47
        %p199 = pneg %p44
        %p200 = pneg %p73
        %p201 = pneg %p70
        %p202 = scmp.lt.s32.totalorder %s24, 1
        %s203 = scalar_select %p202, %s24, 1
        %p204 = scmp.lt.s32.totalorder %s23, 0
        %s205 = scalar_select %p204, %s23, 0
        %s206 = sadd.s32 %s205, %s203
        %s207 = smul.addr %s206, 2
        %s208 = scalar_lea.vmem %s2, %s207
        %p209 = pneg %p101
        %p210 = pneg %p98
        %p211 = pneg %p129
        %p212 = pneg %p126
        %s213 = sand.u32 %s116, 1
        %s214 = scalar_lea.sflag [#allocation4], %s213
        %s215 = sand.u32 %s116, 1
        %s216 = smul.addr %s215, 8
        %s217 = scalar_lea.vmem [#allocation7], %s216
        %p218 = scmp.lt.s32.totalorder %s24, 1
        %s219 = scalar_select %p218, %s24, 1
        %p220 = scmp.lt.s32.totalorder %s23, 0
        %s221 = scalar_select %p220, %s23, 0
        %s222 = sadd.s32 %s221, %s219
        %s223 = smul.addr %s222, 2
        %s224 = scalar_lea.vmem %s2, %s223
        %v225 = vld [vmem:[%s224] sm:$0x3]
        %v226 = vld [vmem:[#allocation6] sm:$0x3]
        %s227 = scalar_lea.vmem [#allocation6], 2
        %v228 = vld [vmem:[%s227] sm:$0x3]
        %s229 = smul.u32 %s24, 128
        %s230 = sld [smem:[#allocation2 + %s229]]
        %s231 = sadd.s32 %s229, 1
        %s232 = sld [smem:[#allocation2 + %s231]]
        %s233 = sadd.s32 %s229, 2
        %s234 = sld [smem:[#allocation2 + %s233]]
        %v235 = vstv %s230
        %v236 = vmul.f32 %v235, %v226
        %v237 = vstv %s232
        %v238 = vmul.f32 %v237, %v228
        %v239 = vadd.f32 %v236, %v238
        %v240 = vstv %s234
        %v241 = vadd.f32 %v239, %v240
        %v242 = vmul.f32 %v241, %v225
        %243 = vst [vmem:[%s217] sm:$0x3] %v242
        %s244 = sadd.s32 %s229, 3
        %s245 = sld [smem:[#allocation2 + %s244]]
        %s246 = sadd.s32 %s229, 4
        %s247 = sld [smem:[#allocation2 + %s246]]
        %s248 = sadd.s32 %s229, 5
        %s249 = sld [smem:[#allocation2 + %s248]]
        %v250 = vstv %s245
        %v251 = vmul.f32 %v250, %v226
        %v252 = vstv %s247
        %v253 = vmul.f32 %v252, %v228
        %v254 = vadd.f32 %v251, %v253
        %v255 = vstv %s249
        %v256 = vadd.f32 %v254, %v255
        %v257 = vmul.f32 %v256, %v225
        %s258 = scalar_lea.vmem %s217, 2 [#allocation7]
        %259 = vst [vmem:[%s258] sm:$0x3] %v257
        %s260 = sadd.s32 %s229, 6
        %s261 = sld [smem:[#allocation2 + %s260]]
        %s262 = sadd.s32 %s229, 7
        %s263 = sld [smem:[#allocation2 + %s262]]
        %s264 = sadd.s32 %s229, 8
        %s265 = sld [smem:[#allocation2 + %s264]]
        %v266 = vstv %s261
        %v267 = vmul.f32 %v266, %v226
        %v268 = vstv %s263
        %v269 = vmul.f32 %v268, %v228
        %v270 = vadd.f32 %v267, %v269
        %v271 = vstv %s265
        %v272 = vadd.f32 %v270, %v271
        %v273 = vmul.f32 %v272, %v225
        %s274 = scalar_lea.vmem %s217, 4 [#allocation7]
        %275 = vst [vmem:[%s274] sm:$0x3] %v273
        %s276 = scalar_lea.vmem %s217, 6 [#allocation7]
        %277 = vst [vmem:[%s276] sm:$0x3] 1.0
        %s278 = sand.u32 %s116, 1
        %s279 = scalar_lea.sflag [#allocation4], %s278
        %s280 = sand.u32 %s116, 1
        %s281 = smul.addr %s280, 8
        %s282 = scalar_lea.vmem [#allocation7], %s281
        // Predicated region
        $region41: #{tpu_custom_call.1} parent=31 // pred_check
          %p283 = pneg %p126
        $region42: #{tpu_custom_call.1} parent=31 // pred_check_branch
          %285 = sbr.rel (%p283) target = $region44
        $region43: #{tpu_custom_call.1} parent=31 // pred_region
          %s287 = ssub.s32 128, 128
          %288 = vsyncadd %s279, %s287
          %s289 = smul.addr %s24, 4
          %s290 = sadd.s32 %s23, %s289
          %s291 = smul.addr %s290, 32
          %s292 = scalar_lea.hbm %s3, %s291
          %s293 = sshll.u32 %s282, 4
          %s294 = int_to_ptr.vmem [resolvable:$true] %s293
          %299 = dma.vmem_to_hbm [thread:$0]  %s294, 128, %s292, %s279, 32, 32, 2
        $region44: #{tpu_custom_call.1} parent=31 // pred_fallthru
          _
      $region32: #{tpu_custom_call.1} parent=5 // pred_fallthru
        _
      %p300 = scmp.le.s32.totalorder 2, %s14
      // Predicated region
      $region45: #{tpu_custom_call.1} parent=5 // pred_check
        %p301 = pneg %p300
      $region46: #{tpu_custom_call.1} parent=5 // pred_check_branch
        %303 = sbr.rel (%p301) target = $region48
      $region47: #{tpu_custom_call.1} parent=5 // pred_region
        %s304 = ssub.s32 %s14, 2
        // Predicated region
        $region49: #{tpu_custom_call.1} parent=47 // pred_check
          %p305 = pneg %p132
        $region50: #{tpu_custom_call.1} parent=47 // pred_check_branch
          %307 = sbr.rel (%p305) target = $region52
        $region51: #{tpu_custom_call.1} parent=47 // pred_region
          %s308 = sand.u32 %s117, 1
          %s309 = scalar_lea.sflag [#allocation4], %s308
          %s310 = sand.u32 %s117, 1
          %s311 = smul.addr %s310, 8
          %s312 = scalar_lea.vmem [#allocation7], %s311
          %313 = dma.done %s309, 128
        $region52: #{tpu_custom_call.1} parent=47 // pred_fallthru
          _
      $region48: #{tpu_custom_call.1} parent=5 // pred_fallthru
        _
    $region6: #{tpu_custom_call.1} parent=1 // loop_footer
      %s18 = sadd.s32 1, %s14
    $region7: #{tpu_custom_call.1} parent=1 // loop_footer_branch
      %13 = sbr.rel target = $region3
    $region8: #{tpu_custom_call.1} parent=1 // loop_exit
      _
    %314 = vsyncpa [#allocation3], 1
    %s315 = scalar_lea.sflag [#allocation3], 1
    %316 = vsyncpa %s315, 1
    %317 = vsyncpa [#allocation4], 1
    %s318 = scalar_lea.sflag [#allocation4], 1
    %319 = vsyncpa %s318, 1
    %320 = vsyncpa [#allocation5], 1
    %s321 = scalar_lea.sflag [#allocation5], 1
    %322 = vsyncpa %s321, 1

</llo_original>
